<compile_context>
chip_gen: v7x
topology: tpu7x:2x2x1
jax: 0.10.0
libtpu: 0.0.40
codegen_flags: <defaults>
</compile_context>

<pallas_src>
import math
import functools

import jax
import jax.numpy as jnp
from jax.experimental import pallas as pl
from jax.experimental.pallas import tpu as pltpu


def lstm_kernel(xf_ref, wx_ref, wh_ref, b_ref, wf_ref, bf_ref, out_ref, *, T, Bp, H):
    """Whole LSTM forward pass in one invocation.

    xf_ref : (T*Bp, D)  time-major flattened input
    wx_ref : (D, 4H)    wh_ref: (H, 4H)    b_ref : (1, 4H)  (combined x2h+h2h bias)
    wf_ref : (H, Op)    bf_ref: (1, Op)    out_ref: (Bp, Op)
    """
    # ---- Prologue: hoist the whole input projection into a single MXU matmul. ----
    # (T*Bp, D) @ (D, 4H) -> (T*Bp, 4H); stays resident in vregs (tiny).
    xg = (
        jnp.dot(xf_ref[...], wx_ref[...], preferred_element_type=jnp.float32)
        + b_ref[...]
    )

    wh = wh_ref[...]  # (H, 4H), loaded once

    # ---- Serial recurrence: one matmul + gate math per step, state in vregs. ----
    h = jnp.zeros((Bp, H), jnp.float32)
    c = jnp.zeros((Bp, H), jnp.float32)
    for t in range(T):  # static trip count -> fully unrolled, static slices
        gates = xg[t * Bp:(t + 1) * Bp, :] + jnp.dot(
            h, wh, preferred_element_type=jnp.float32
        )  # (Bp, 4H) == exactly one f32 vreg
        # Run EUP over the whole vreg (2 transcendental passes instead of 4),
        # slice the activated chunks afterwards.
        sig = jax.nn.sigmoid(gates)
        th = jnp.tanh(gates)
        f_gate = sig[:, 0 * H:1 * H]
        i_gate = sig[:, 1 * H:2 * H]
        g_gate = th[:, 2 * H:3 * H]
        o_gate = sig[:, 3 * H:4 * H]
        c = f_gate * c + i_gate * g_gate
        h = o_gate * jnp.tanh(c)

    # ---- Final fc on the last hidden state; lane-dense (Bp, Op) store. ----
    out_ref[...] = (
        jnp.dot(h, wf_ref[...], preferred_element_type=jnp.float32) + bf_ref[...]
    )


def lstm_model_forward(x, wx, wh, b, wf, bf):
    """x: (batch, seq, input_dim). Returns (batch, output_dim)."""
    B, T, D = x.shape
    H = wh.shape[0]
    O = wf.shape[1]

    # Pad batch to a full sublane tile (8 for f32) and fc output to a full lane
    # tile (128) so every vreg / store is dense. Padded rows/cols are sliced off.
    B_pad = pl.cdiv(B, 8) * 8
    O_pad = pl.cdiv(O, 128) * 128

    # Time-major flat layout (T*Bp, D). These wrapper ops touch ~1 KiB, negligible,
    # and let the in-kernel input projection be a single matmul whose per-timestep
    # slab is a contiguous, sublane-aligned (Bp, 4H) window.
    x_t = jnp.swapaxes(x, 0, 1)                                  # (T, B, D)
    x_p = jnp.zeros((T, B_pad, D), jnp.float32).at[:, :B, :].set(x_t)
    x_f = x_p.reshape(T * B_pad, D)                              # (T*Bp, D)

    wf_p = jnp.zeros((H, O_pad), jnp.float32).at[:, :O].set(wf)
    bf_p = jnp.zeros((1, O_pad), jnp.float32).at[0, :O].set(bf)
    b2 = b.reshape(1, 4 * H)

    kernel = functools.partial(lstm_kernel, T=T, Bp=B_pad, H=H)

    grid_spec = pltpu.PrefetchScalarGridSpec(
        num_scalar_prefetch=0,
        grid=(1,),                                               # single invocation
        in_specs=[
            pl.BlockSpec((T * B_pad, D), lambda i: (0, 0)),      # x (time-major flat)
            pl.BlockSpec((D, 4 * H), lambda i: (0, 0)),          # Wx
            pl.BlockSpec((H, 4 * H), lambda i: (0, 0)),          # Wh
            pl.BlockSpec((1, 4 * H), lambda i: (0, 0)),          # combined bias
            pl.BlockSpec((H, O_pad), lambda i: (0, 0)),          # fc weight (padded)
            pl.BlockSpec((1, O_pad), lambda i: (0, 0)),          # fc bias (padded)
        ],
        out_specs=pl.BlockSpec((B_pad, O_pad), lambda i: (0, 0)),
    )

    out_p = pl.pallas_call(
        kernel,
        out_shape=jax.ShapeDtypeStruct((B_pad, O_pad), jnp.float32),
        grid_spec=grid_spec,
        compiler_params=pltpu.CompilerParams(
            dimension_semantics=("arbitrary",),
        ),
    )(x_f, wx, wh, b2, wf_p, bf_p)

    return out_p[:B, :O]


def init_params(key, input_dim, hidden_dim, output_dim):
    """Deterministic init matching the PyTorch shapes (uniform(-std, std))."""
    k1, k2, k3, k4, k5, k6 = jax.random.split(key, 6)
    std = 1.0 / math.sqrt(hidden_dim)
    # x2h / h2h stored as (in, 4H) == transpose of torch Linear weight (4H, in)
    wx = jax.random.uniform(k1, (input_dim, 4 * hidden_dim), jnp.float32, -std, std)
    wh = jax.random.uniform(k2, (hidden_dim, 4 * hidden_dim), jnp.float32, -std, std)
    bx = jax.random.uniform(k3, (4 * hidden_dim,), jnp.float32, -std, std)
    bh = jax.random.uniform(k4, (4 * hidden_dim,), jnp.float32, -std, std)
    b = bx + bh  # combined bias (x2h bias + h2h bias)
    std_fc = 1.0 / math.sqrt(hidden_dim)
    wf = jax.random.uniform(k5, (hidden_dim, output_dim), jnp.float32, -std_fc, std_fc)
    bf = jax.random.uniform(k6, (output_dim,), jnp.float32, -std_fc, std_fc)
    return wx, wh, b, wf, bf


def reference_forward(x, wx, wh, b, wf, bf):
    """Pure-JAX reference of the same math (for sanity checking)."""
    B, T, D = x.shape
    H = wh.shape[0]
    h = jnp.zeros((B, H), jnp.float32)
    c = jnp.zeros((B, H), jnp.float32)
    for t in range(T):
        gates = x[:, t, :] @ wx + h @ wh + b
        f = jax.nn.sigmoid(gates[:, 0 * H:1 * H])
        i = jax.nn.sigmoid(gates[:, 1 * H:2 * H])
        g = jnp.tanh(gates[:, 2 * H:3 * H])
        o = jax.nn.sigmoid(gates[:, 3 * H:4 * H])
        c = f * c + i * g
        h = o * jnp.tanh(c)
    return h @ wf + bf


if __name__ == "__main__":
    batch, seq, input_dim, hidden_dim, output_dim = 2, 8, 16, 32, 10

    key = jax.random.PRNGKey(0)
    kx, kp = jax.random.split(key)
    x = jax.random.normal(kx, (batch, seq, input_dim), jnp.float32)
    wx, wh, b, wf, bf = init_params(kp, input_dim, hidden_dim, output_dim)

    out = lstm_model_forward(x, wx, wh, b, wf, bf)
    out = jax.block_until_ready(out)

    ref = reference_forward(x, wx, wh, b, wf, bf)
    assert out.shape == (batch, output_dim)
    assert jnp.allclose(out, ref, atol=1e-5, rtol=1e-5), "mismatch vs reference"

    print("KERNEL_OK")
</pallas_src>

<mosaic_0001>
module attributes {stable_mosaic.version = 11 : i64} {
  func.func @lstm_kernel(%arg0: i32, %arg1: memref<64x16xf32, #tpu.memory_space<vmem>>, %arg2: memref<16x128xf32, #tpu.memory_space<vmem>>, %arg3: memref<32x128xf32, #tpu.memory_space<vmem>>, %arg4: memref<1x128xf32, #tpu.memory_space<vmem>>, %arg5: memref<32x128xf32, #tpu.memory_space<vmem>>, %arg6: memref<1x128xf32, #tpu.memory_space<vmem>>, %arg7: memref<8x128xf32, #tpu.memory_space<vmem>>) attributes {dimension_semantics = [#tpu.dimension_semantics<arbitrary>], iteration_bounds = array<i64: 1>, scalar_prefetch = 0 : i64, scratch_operands = 0 : i64, tpu.core_type = #tpu.core_type<tc>, window_params = [{pipeline_mode = #tpu.pipeline_mode<synchronous>, transform_indices = @transform_0, window_bounds = array<i64: 64, 16>}, {pipeline_mode = #tpu.pipeline_mode<synchronous>, transform_indices = @transform_1, window_bounds = array<i64: 16, 128>}, {pipeline_mode = #tpu.pipeline_mode<synchronous>, transform_indices = @transform_2, window_bounds = array<i64: 32, 128>}, {pipeline_mode = #tpu.pipeline_mode<synchronous>, transform_indices = @transform_3, window_bounds = array<i64: 1, 128>}, {pipeline_mode = #tpu.pipeline_mode<synchronous>, transform_indices = @transform_4, window_bounds = array<i64: 32, 128>}, {pipeline_mode = #tpu.pipeline_mode<synchronous>, transform_indices = @transform_5, window_bounds = array<i64: 1, 128>}, {pipeline_mode = #tpu.pipeline_mode<synchronous>, transform_indices = @transform_6, window_bounds = array<i64: 8, 128>}]} {
    %c0 = arith.constant 0 : index
    %c0_0 = arith.constant 0 : index
    %0 = vector.load %arg1[%c0, %c0_0] : memref<64x16xf32, #tpu.memory_space<vmem>>, vector<64x16xf32>
    %c0_1 = arith.constant 0 : index
    %c0_2 = arith.constant 0 : index
    %1 = vector.load %arg2[%c0_1, %c0_2] : memref<16x128xf32, #tpu.memory_space<vmem>>, vector<16x128xf32>
    %cst = arith.constant dense<0.000000e+00> : vector<64x128xf32>
    %2 = tpu.matmul %0, %1, %cst {dimension_numbers = #tpu.dot_dimension_numbers<[1], [0], [0], [1], [0, 0, 1, 1], [], []>} : vector<64x16xf32>, vector<16x128xf32>, vector<64x128xf32> -> vector<64x128xf32>
    %c0_3 = arith.constant 0 : index
    %c0_4 = arith.constant 0 : index
    %3 = vector.load %arg4[%c0_3, %c0_4] : memref<1x128xf32, #tpu.memory_space<vmem>>, vector<1x128xf32>
    %4 = vector.broadcast %3 : vector<1x128xf32> to vector<64x128xf32>
    %5 = arith.addf %2, %4 : vector<64x128xf32>
    %c0_5 = arith.constant 0 : index
    %c0_6 = arith.constant 0 : index
    %6 = vector.load %arg3[%c0_5, %c0_6] : memref<32x128xf32, #tpu.memory_space<vmem>>, vector<32x128xf32>
    %cst_7 = arith.constant 0.000000e+00 : f32
    %7 = vector.broadcast %cst_7 : f32 to vector<8x32xf32>
    %cst_8 = arith.constant 0.000000e+00 : f32
    %8 = vector.broadcast %cst_8 : f32 to vector<8x32xf32>
    %9 = vector.extract_strided_slice %5 {offsets = [0, 0], sizes = [8, 128], strides = [1, 1]} : vector<64x128xf32> to vector<8x128xf32>
    %cst_9 = arith.constant dense<0.000000e+00> : vector<8x128xf32>
    %10 = tpu.matmul %7, %6, %cst_9 {dimension_numbers = #tpu.dot_dimension_numbers<[1], [0], [0], [1], [0, 0, 1, 1], [], []>} : vector<8x32xf32>, vector<32x128xf32>, vector<8x128xf32> -> vector<8x128xf32>
    %11 = arith.addf %9, %10 : vector<8x128xf32>
    %12 = arith.negf %11 : vector<8x128xf32>
    %13 = math.exp %12 : vector<8x128xf32>
    %cst_10 = arith.constant 1.000000e+00 : f32
    %14 = vector.broadcast %cst_10 : f32 to vector<8x128xf32>
    %15 = arith.addf %14, %13 : vector<8x128xf32>
    %16 = arith.divf %14, %15 : vector<8x128xf32>
    %17 = math.tanh %11 : vector<8x128xf32>
    %18 = vector.extract_strided_slice %16 {offsets = [0, 0], sizes = [8, 32], strides = [1, 1]} : vector<8x128xf32> to vector<8x32xf32>
    %19 = vector.extract_strided_slice %16 {offsets = [0, 32], sizes = [8, 32], strides = [1, 1]} : vector<8x128xf32> to vector<8x32xf32>
    %20 = vector.extract_strided_slice %17 {offsets = [0, 64], sizes = [8, 32], strides = [1, 1]} : vector<8x128xf32> to vector<8x32xf32>
    %21 = vector.extract_strided_slice %16 {offsets = [0, 96], sizes = [8, 32], strides = [1, 1]} : vector<8x128xf32> to vector<8x32xf32>
    %22 = arith.mulf %18, %8 : vector<8x32xf32>
    %23 = arith.mulf %19, %20 : vector<8x32xf32>
    %24 = arith.addf %22, %23 : vector<8x32xf32>
    %25 = math.tanh %24 : vector<8x32xf32>
    %26 = arith.mulf %21, %25 : vector<8x32xf32>
    %27 = vector.extract_strided_slice %5 {offsets = [8, 0], sizes = [8, 128], strides = [1, 1]} : vector<64x128xf32> to vector<8x128xf32>
    %cst_11 = arith.constant dense<0.000000e+00> : vector<8x128xf32>
    %28 = tpu.matmul %26, %6, %cst_11 {dimension_numbers = #tpu.dot_dimension_numbers<[1], [0], [0], [1], [0, 0, 1, 1], [], []>} : vector<8x32xf32>, vector<32x128xf32>, vector<8x128xf32> -> vector<8x128xf32>
    %29 = arith.addf %27, %28 : vector<8x128xf32>
    %30 = arith.negf %29 : vector<8x128xf32>
    %31 = math.exp %30 : vector<8x128xf32>
    %cst_12 = arith.constant 1.000000e+00 : f32
    %32 = vector.broadcast %cst_12 : f32 to vector<8x128xf32>
    %33 = arith.addf %32, %31 : vector<8x128xf32>
    %34 = arith.divf %32, %33 : vector<8x128xf32>
    %35 = math.tanh %29 : vector<8x128xf32>
    %36 = vector.extract_strided_slice %34 {offsets = [0, 0], sizes = [8, 32], strides = [1, 1]} : vector<8x128xf32> to vector<8x32xf32>
    %37 = vector.extract_strided_slice %34 {offsets = [0, 32], sizes = [8, 32], strides = [1, 1]} : vector<8x128xf32> to vector<8x32xf32>
    %38 = vector.extract_strided_slice %35 {offsets = [0, 64], sizes = [8, 32], strides = [1, 1]} : vector<8x128xf32> to vector<8x32xf32>
    %39 = vector.extract_strided_slice %34 {offsets = [0, 96], sizes = [8, 32], strides = [1, 1]} : vector<8x128xf32> to vector<8x32xf32>
    %40 = arith.mulf %36, %24 : vector<8x32xf32>
    %41 = arith.mulf %37, %38 : vector<8x32xf32>
    %42 = arith.addf %40, %41 : vector<8x32xf32>
    %43 = math.tanh %42 : vector<8x32xf32>
    %44 = arith.mulf %39, %43 : vector<8x32xf32>
    %45 = vector.extract_strided_slice %5 {offsets = [16, 0], sizes = [8, 128], strides = [1, 1]} : vector<64x128xf32> to vector<8x128xf32>
    %cst_13 = arith.constant dense<0.000000e+00> : vector<8x128xf32>
    %46 = tpu.matmul %44, %6, %cst_13 {dimension_numbers = #tpu.dot_dimension_numbers<[1], [0], [0], [1], [0, 0, 1, 1], [], []>} : vector<8x32xf32>, vector<32x128xf32>, vector<8x128xf32> -> vector<8x128xf32>
    %47 = arith.addf %45, %46 : vector<8x128xf32>
    %48 = arith.negf %47 : vector<8x128xf32>
    %49 = math.exp %48 : vector<8x128xf32>
    %cst_14 = arith.constant 1.000000e+00 : f32
    %50 = vector.broadcast %cst_14 : f32 to vector<8x128xf32>
    %51 = arith.addf %50, %49 : vector<8x128xf32>
    %52 = arith.divf %50, %51 : vector<8x128xf32>
    %53 = math.tanh %47 : vector<8x128xf32>
    %54 = vector.extract_strided_slice %52 {offsets = [0, 0], sizes = [8, 32], strides = [1, 1]} : vector<8x128xf32> to vector<8x32xf32>
    %55 = vector.extract_strided_slice %52 {offsets = [0, 32], sizes = [8, 32], strides = [1, 1]} : vector<8x128xf32> to vector<8x32xf32>
    %56 = vector.extract_strided_slice %53 {offsets = [0, 64], sizes = [8, 32], strides = [1, 1]} : vector<8x128xf32> to vector<8x32xf32>
    %57 = vector.extract_strided_slice %52 {offsets = [0, 96], sizes = [8, 32], strides = [1, 1]} : vector<8x128xf32> to vector<8x32xf32>
    %58 = arith.mulf %54, %42 : vector<8x32xf32>
    %59 = arith.mulf %55, %56 : vector<8x32xf32>
    %60 = arith.addf %58, %59 : vector<8x32xf32>
    %61 = math.tanh %60 : vector<8x32xf32>
    %62 = arith.mulf %57, %61 : vector<8x32xf32>
    %63 = vector.extract_strided_slice %5 {offsets = [24, 0], sizes = [8, 128], strides = [1, 1]} : vector<64x128xf32> to vector<8x128xf32>
    %cst_15 = arith.constant dense<0.000000e+00> : vector<8x128xf32>
    %64 = tpu.matmul %62, %6, %cst_15 {dimension_numbers = #tpu.dot_dimension_numbers<[1], [0], [0], [1], [0, 0, 1, 1], [], []>} : vector<8x32xf32>, vector<32x128xf32>, vector<8x128xf32> -> vector<8x128xf32>
    %65 = arith.addf %63, %64 : vector<8x128xf32>
    %66 = arith.negf %65 : vector<8x128xf32>
    %67 = math.exp %66 : vector<8x128xf32>
    %cst_16 = arith.constant 1.000000e+00 : f32
    %68 = vector.broadcast %cst_16 : f32 to vector<8x128xf32>
    %69 = arith.addf %68, %67 : vector<8x128xf32>
    %70 = arith.divf %68, %69 : vector<8x128xf32>
    %71 = math.tanh %65 : vector<8x128xf32>
    %72 = vector.extract_strided_slice %70 {offsets = [0, 0], sizes = [8, 32], strides = [1, 1]} : vector<8x128xf32> to vector<8x32xf32>
    %73 = vector.extract_strided_slice %70 {offsets = [0, 32], sizes = [8, 32], strides = [1, 1]} : vector<8x128xf32> to vector<8x32xf32>
    %74 = vector.extract_strided_slice %71 {offsets = [0, 64], sizes = [8, 32], strides = [1, 1]} : vector<8x128xf32> to vector<8x32xf32>
    %75 = vector.extract_strided_slice %70 {offsets = [0, 96], sizes = [8, 32], strides = [1, 1]} : vector<8x128xf32> to vector<8x32xf32>
    %76 = arith.mulf %72, %60 : vector<8x32xf32>
    %77 = arith.mulf %73, %74 : vector<8x32xf32>
    %78 = arith.addf %76, %77 : vector<8x32xf32>
    %79 = math.tanh %78 : vector<8x32xf32>
    %80 = arith.mulf %75, %79 : vector<8x32xf32>
    %81 = vector.extract_strided_slice %5 {offsets = [32, 0], sizes = [8, 128], strides = [1, 1]} : vector<64x128xf32> to vector<8x128xf32>
    %cst_17 = arith.constant dense<0.000000e+00> : vector<8x128xf32>
    %82 = tpu.matmul %80, %6, %cst_17 {dimension_numbers = #tpu.dot_dimension_numbers<[1], [0], [0], [1], [0, 0, 1, 1], [], []>} : vector<8x32xf32>, vector<32x128xf32>, vector<8x128xf32> -> vector<8x128xf32>
    %83 = arith.addf %81, %82 : vector<8x128xf32>
    %84 = arith.negf %83 : vector<8x128xf32>
    %85 = math.exp %84 : vector<8x128xf32>
    %cst_18 = arith.constant 1.000000e+00 : f32
    %86 = vector.broadcast %cst_18 : f32 to vector<8x128xf32>
    %87 = arith.addf %86, %85 : vector<8x128xf32>
    %88 = arith.divf %86, %87 : vector<8x128xf32>
    %89 = math.tanh %83 : vector<8x128xf32>
    %90 = vector.extract_strided_slice %88 {offsets = [0, 0], sizes = [8, 32], strides = [1, 1]} : vector<8x128xf32> to vector<8x32xf32>
    %91 = vector.extract_strided_slice %88 {offsets = [0, 32], sizes = [8, 32], strides = [1, 1]} : vector<8x128xf32> to vector<8x32xf32>
    %92 = vector.extract_strided_slice %89 {offsets = [0, 64], sizes = [8, 32], strides = [1, 1]} : vector<8x128xf32> to vector<8x32xf32>
    %93 = vector.extract_strided_slice %88 {offsets = [0, 96], sizes = [8, 32], strides = [1, 1]} : vector<8x128xf32> to vector<8x32xf32>
    %94 = arith.mulf %90, %78 : vector<8x32xf32>
    %95 = arith.mulf %91, %92 : vector<8x32xf32>
    %96 = arith.addf %94, %95 : vector<8x32xf32>
    %97 = math.tanh %96 : vector<8x32xf32>
    %98 = arith.mulf %93, %97 : vector<8x32xf32>
    %99 = vector.extract_strided_slice %5 {offsets = [40, 0], sizes = [8, 128], strides = [1, 1]} : vector<64x128xf32> to vector<8x128xf32>
    %cst_19 = arith.constant dense<0.000000e+00> : vector<8x128xf32>
    %100 = tpu.matmul %98, %6, %cst_19 {dimension_numbers = #tpu.dot_dimension_numbers<[1], [0], [0], [1], [0, 0, 1, 1], [], []>} : vector<8x32xf32>, vector<32x128xf32>, vector<8x128xf32> -> vector<8x128xf32>
    %101 = arith.addf %99, %100 : vector<8x128xf32>
    %102 = arith.negf %101 : vector<8x128xf32>
    %103 = math.exp %102 : vector<8x128xf32>
    %cst_20 = arith.constant 1.000000e+00 : f32
    %104 = vector.broadcast %cst_20 : f32 to vector<8x128xf32>
    %105 = arith.addf %104, %103 : vector<8x128xf32>
    %106 = arith.divf %104, %105 : vector<8x128xf32>
    %107 = math.tanh %101 : vector<8x128xf32>
    %108 = vector.extract_strided_slice %106 {offsets = [0, 0], sizes = [8, 32], strides = [1, 1]} : vector<8x128xf32> to vector<8x32xf32>
    %109 = vector.extract_strided_slice %106 {offsets = [0, 32], sizes = [8, 32], strides = [1, 1]} : vector<8x128xf32> to vector<8x32xf32>
    %110 = vector.extract_strided_slice %107 {offsets = [0, 64], sizes = [8, 32], strides = [1, 1]} : vector<8x128xf32> to vector<8x32xf32>
    %111 = vector.extract_strided_slice %106 {offsets = [0, 96], sizes = [8, 32], strides = [1, 1]} : vector<8x128xf32> to vector<8x32xf32>
    %112 = arith.mulf %108, %96 : vector<8x32xf32>
    %113 = arith.mulf %109, %110 : vector<8x32xf32>
    %114 = arith.addf %112, %113 : vector<8x32xf32>
    %115 = math.tanh %114 : vector<8x32xf32>
    %116 = arith.mulf %111, %115 : vector<8x32xf32>
    %117 = vector.extract_strided_slice %5 {offsets = [48, 0], sizes = [8, 128], strides = [1, 1]} : vector<64x128xf32> to vector<8x128xf32>
    %cst_21 = arith.constant dense<0.000000e+00> : vector<8x128xf32>
    %118 = tpu.matmul %116, %6, %cst_21 {dimension_numbers = #tpu.dot_dimension_numbers<[1], [0], [0], [1], [0, 0, 1, 1], [], []>} : vector<8x32xf32>, vector<32x128xf32>, vector<8x128xf32> -> vector<8x128xf32>
    %119 = arith.addf %117, %118 : vector<8x128xf32>
    %120 = arith.negf %119 : vector<8x128xf32>
    %121 = math.exp %120 : vector<8x128xf32>
    %cst_22 = arith.constant 1.000000e+00 : f32
    %122 = vector.broadcast %cst_22 : f32 to vector<8x128xf32>
    %123 = arith.addf %122, %121 : vector<8x128xf32>
    %124 = arith.divf %122, %123 : vector<8x128xf32>
    %125 = math.tanh %119 : vector<8x128xf32>
    %126 = vector.extract_strided_slice %124 {offsets = [0, 0], sizes = [8, 32], strides = [1, 1]} : vector<8x128xf32> to vector<8x32xf32>
    %127 = vector.extract_strided_slice %124 {offsets = [0, 32], sizes = [8, 32], strides = [1, 1]} : vector<8x128xf32> to vector<8x32xf32>
    %128 = vector.extract_strided_slice %125 {offsets = [0, 64], sizes = [8, 32], strides = [1, 1]} : vector<8x128xf32> to vector<8x32xf32>
    %129 = vector.extract_strided_slice %124 {offsets = [0, 96], sizes = [8, 32], strides = [1, 1]} : vector<8x128xf32> to vector<8x32xf32>
    %130 = arith.mulf %126, %114 : vector<8x32xf32>
    %131 = arith.mulf %127, %128 : vector<8x32xf32>
    %132 = arith.addf %130, %131 : vector<8x32xf32>
    %133 = math.tanh %132 : vector<8x32xf32>
    %134 = arith.mulf %129, %133 : vector<8x32xf32>
    %135 = vector.extract_strided_slice %5 {offsets = [56, 0], sizes = [8, 128], strides = [1, 1]} : vector<64x128xf32> to vector<8x128xf32>
    %cst_23 = arith.constant dense<0.000000e+00> : vector<8x128xf32>
    %136 = tpu.matmul %134, %6, %cst_23 {dimension_numbers = #tpu.dot_dimension_numbers<[1], [0], [0], [1], [0, 0, 1, 1], [], []>} : vector<8x32xf32>, vector<32x128xf32>, vector<8x128xf32> -> vector<8x128xf32>
    %137 = arith.addf %135, %136 : vector<8x128xf32>
    %138 = arith.negf %137 : vector<8x128xf32>
    %139 = math.exp %138 : vector<8x128xf32>
    %cst_24 = arith.constant 1.000000e+00 : f32
    %140 = vector.broadcast %cst_24 : f32 to vector<8x128xf32>
    %141 = arith.addf %140, %139 : vector<8x128xf32>
    %142 = arith.divf %140, %141 : vector<8x128xf32>
    %143 = math.tanh %137 : vector<8x128xf32>
    %144 = vector.extract_strided_slice %142 {offsets = [0, 0], sizes = [8, 32], strides = [1, 1]} : vector<8x128xf32> to vector<8x32xf32>
    %145 = vector.extract_strided_slice %142 {offsets = [0, 32], sizes = [8, 32], strides = [1, 1]} : vector<8x128xf32> to vector<8x32xf32>
    %146 = vector.extract_strided_slice %143 {offsets = [0, 64], sizes = [8, 32], strides = [1, 1]} : vector<8x128xf32> to vector<8x32xf32>
    %147 = vector.extract_strided_slice %142 {offsets = [0, 96], sizes = [8, 32], strides = [1, 1]} : vector<8x128xf32> to vector<8x32xf32>
    %148 = arith.mulf %144, %132 : vector<8x32xf32>
    %149 = arith.mulf %145, %146 : vector<8x32xf32>
    %150 = arith.addf %148, %149 : vector<8x32xf32>
    %151 = math.tanh %150 : vector<8x32xf32>
    %152 = arith.mulf %147, %151 : vector<8x32xf32>
    %c0_25 = arith.constant 0 : index
    %c0_26 = arith.constant 0 : index
    %153 = vector.load %arg5[%c0_25, %c0_26] : memref<32x128xf32, #tpu.memory_space<vmem>>, vector<32x128xf32>
    %cst_27 = arith.constant dense<0.000000e+00> : vector<8x128xf32>
    %154 = tpu.matmul %152, %153, %cst_27 {dimension_numbers = #tpu.dot_dimension_numbers<[1], [0], [0], [1], [0, 0, 1, 1], [], []>} : vector<8x32xf32>, vector<32x128xf32>, vector<8x128xf32> -> vector<8x128xf32>
    %c0_28 = arith.constant 0 : index
    %c0_29 = arith.constant 0 : index
    %155 = vector.load %arg6[%c0_28, %c0_29] : memref<1x128xf32, #tpu.memory_space<vmem>>, vector<1x128xf32>
    %156 = vector.broadcast %155 : vector<1x128xf32> to vector<8x128xf32>
    %157 = arith.addf %154, %156 : vector<8x128xf32>
    %c0_30 = arith.constant 0 : index
    %c0_31 = arith.constant 0 : index
    %158 = vector.load %arg7[%c0_30, %c0_31] : memref<8x128xf32, #tpu.memory_space<vmem>>, vector<8x128xf32>
    tpu.vector_store %arg7[%c0_30, %c0_31], %157 {strides = array<i32>} : memref<8x128xf32, #tpu.memory_space<vmem>>, vector<8x128xf32>,
    return
  }
  func.func @transform_0(%arg0: i32) -> (i32, i32) {
    %c0_i32 = arith.constant 0 : i32
    %c0_i32_0 = arith.constant 0 : i32
    %c0_i32_1 = arith.constant 0 : i32
    return %c0_i32, %c0_i32_0 : i32, i32
  }
  func.func @transform_1(%arg0: i32) -> (i32, i32) {
    %c0_i32 = arith.constant 0 : i32
    %c0_i32_0 = arith.constant 0 : i32
    %c0_i32_1 = arith.constant 0 : i32
    return %c0_i32, %c0_i32_0 : i32, i32
  }
  func.func @transform_2(%arg0: i32) -> (i32, i32) {
    %c0_i32 = arith.constant 0 : i32
    %c0_i32_0 = arith.constant 0 : i32
    %c0_i32_1 = arith.constant 0 : i32
    return %c0_i32, %c0_i32_0 : i32, i32
  }
  func.func @transform_3(%arg0: i32) -> (i32, i32) {
    %c0_i32 = arith.constant 0 : i32
    %c0_i32_0 = arith.constant 0 : i32
    %c0_i32_1 = arith.constant 0 : i32
    return %c0_i32, %c0_i32_0 : i32, i32
  }
  func.func @transform_4(%arg0: i32) -> (i32, i32) {
    %c0_i32 = arith.constant 0 : i32
    %c0_i32_0 = arith.constant 0 : i32
    %c0_i32_1 = arith.constant 0 : i32
    return %c0_i32, %c0_i32_0 : i32, i32
  }
  func.func @transform_5(%arg0: i32) -> (i32, i32) {
    %c0_i32 = arith.constant 0 : i32
    %c0_i32_0 = arith.constant 0 : i32
    %c0_i32_1 = arith.constant 0 : i32
    return %c0_i32, %c0_i32_0 : i32, i32
  }
  func.func @transform_6(%arg0: i32) -> (i32, i32) {
    %c0_i32 = arith.constant 0 : i32
    %c0_i32_0 = arith.constant 0 : i32
    %c0_i32_1 = arith.constant 0 : i32
    return %c0_i32, %c0_i32_0 : i32, i32
  }
}

</mosaic_0001>

<llo_original>
// kernel: tpu_custom_call.1
$region0: #{tpu_custom_call.1}
  #allocation0 [shape = 'u32[]', space=smem, size = 0x4, offset = 0x4, fixed_abs, tag = 'smem constant byte address 0x4 - core index']
  #allocation1 [shape = 'u32[144,128]{1,0:T(1,128)}', space=vmem, size = 0x12000, scoped, tag = 'internal scratch']
  %s0 = inlined_call_operand.vmem [shape: f32[64,16], index: 0, kind: input, shape index: {}]
  %s1 = inlined_call_operand.vmem [shape: f32[16,128], index: 1, kind: input, shape index: {}]
  %s2 = inlined_call_operand.vmem [shape: f32[32,128], index: 2, kind: input, shape index: {}]
  %s3 = inlined_call_operand.vmem [shape: f32[1,128], index: 3, kind: input, shape index: {}]
  %s4 = inlined_call_operand.vmem [shape: f32[32,128], index: 4, kind: input, shape index: {}]
  %s5 = inlined_call_operand.vmem [shape: f32[1,128], index: 5, kind: input, shape index: {}]
  %s6 = inlined_call_operand.hbm [shape: f32[8,128], index: 6, kind: output, shape index: {}]
  %s7 = sld [smem:[#allocation0]]
  $region34: #{tpu_custom_call.1} parent=0
    _
  %s9 = ssub.s32 1, %s7
  %s10 = scalar_select 0, %s9, %s7
  $region1: #{tpu_custom_call.1} parent=0
    #allocation2 [shape = 'u8[4096]{0}', space=vmem, size = 0x1000, scoped, tag = 'output window, operand 0, single buffered']
    #allocation3 [shape = 's32[1]{0}', space=sflag, size = 0x4, scoped, tag = 'scoped memory for tpu_custom_call.1']
    %11 = vsyncpa [#allocation3], 0
    // Predicated region
    $region2: #{tpu_custom_call.1} parent=1 // pred_check
      _
    $region3: #{tpu_custom_call.1} parent=1 // pred_check_branch
      %13 = sbr.rel (0) target = $region5
    $region4: #{tpu_custom_call.1} parent=1 // pred_region
      _
    $region5: #{tpu_custom_call.1} parent=1 // pred_fallthru
      _
    // Predicated region
    $region6: #{tpu_custom_call.1} parent=1 // pred_check
      _
    $region7: #{tpu_custom_call.1} parent=1 // pred_check_branch
      %15 = sbr.rel (0) target = $region9
    $region8: #{tpu_custom_call.1} parent=1 // pred_region
      _
    $region9: #{tpu_custom_call.1} parent=1 // pred_fallthru
      _
    // Predicated region
    $region10: #{tpu_custom_call.1} parent=1 // pred_check
      _
    $region11: #{tpu_custom_call.1} parent=1 // pred_check_branch
      %17 = sbr.rel (0) target = $region13
    $region12: #{tpu_custom_call.1} parent=1 // pred_region
      _
    $region13: #{tpu_custom_call.1} parent=1 // pred_fallthru
      _
    // Predicated region
    $region14: #{tpu_custom_call.1} parent=1 // pred_check
      _
    $region15: #{tpu_custom_call.1} parent=1 // pred_check_branch
      %19 = sbr.rel (0) target = $region17
    $region16: #{tpu_custom_call.1} parent=1 // pred_region
      _
    $region17: #{tpu_custom_call.1} parent=1 // pred_fallthru
      _
    // Predicated region
    $region18: #{tpu_custom_call.1} parent=1 // pred_check
      _
    $region19: #{tpu_custom_call.1} parent=1 // pred_check_branch
      %21 = sbr.rel (0) target = $region21
    $region20: #{tpu_custom_call.1} parent=1 // pred_region
      _
    $region21: #{tpu_custom_call.1} parent=1 // pred_fallthru
      _
    // Predicated region
    $region22: #{tpu_custom_call.1} parent=1 // pred_check
      _
    $region23: #{tpu_custom_call.1} parent=1 // pred_check_branch
      %23 = sbr.rel (0) target = $region25
    $region24: #{tpu_custom_call.1} parent=1 // pred_region
      _
    $region25: #{tpu_custom_call.1} parent=1 // pred_fallthru
      _
    %v24 = vld [vmem:[%s0] sm:$0xff]
    %v25 = vld [vmem:[%s0 + $0x8] sm:$0xff]
    %v26 = vld [vmem:[%s0 + $0x10] sm:$0xff]
    %v27 = vld [vmem:[%s0 + $0x18] sm:$0xff]
    %v28 = vld [vmem:[%s0 + $0x20] sm:$0xff]
    %v29 = vld [vmem:[%s0 + $0x28] sm:$0xff]
    %v30 = vld [vmem:[%s0 + $0x30] sm:$0xff]
    %v31 = vld [vmem:[%s0 + $0x38] sm:$0xff]
    %v32 = vld [vmem:[%s1] sm:$0xff]
    %v33 = vld [vmem:[%s1 + $0x8] sm:$0xff]
    %v34 = vld [vmem:[%s3] sm:$0x1]
    %v36 = vlaneseq
    %v37 = vshrl.u32 %v36, 7
    %v38 = vsub.s32 0, %v37
    %v39 = vrot.slane %v34, %v38
    %vm41 = vcmask 130048
    %v43 = vsel %vm41, %v24, 0
    %v46 = vsel %vm41, %v25, 0
    %v49 = vsel %vm41, %v26, 0
    %v52 = vsel %vm41, %v27, 0
    %v55 = vsel %vm41, %v28, 0
    %v58 = vsel %vm41, %v29, 0
    %v61 = vsel %vm41, %v30, 0
    %v64 = vsel %vm41, %v31, 0
    %66 = vmatprep.subr.mxu0 0.0
    %67 = vmatpush1.msra.mxu0 %v32
    %68 = vmatprep.subr.mxu0 0.0
    %69 = vmatpush1.msra.mxu0 %v33
    %70 = vmatprep.subr.mxu0 0.0
    %71 = vmatpush1.msra.mxu0 0.0
    %72 = vmatprep.subr.mxu0 0.0
    %73 = vmatpush1.msra.mxu0 0.0
    %74 = vmatprep.subr.mxu0 0.0
    %75 = vmatpush1.msra.mxu0 0.0
    %76 = vmatprep.subr.mxu0 0.0
    %77 = vmatpush1.msra.mxu0 0.0
    %78 = vmatprep.subr.mxu0 0.0
    %79 = vmatpush1.msra.mxu0 0.0
    %80 = vmatprep.subr.mxu0 0.0
    %81 = vmatpush1.msra.mxu0 0.0
    %82 = vmatprep.subr.mxu0 0.0
    %83 = vmatpush1.msra.mxu0 0.0
    %84 = vmatprep.subr.mxu0 0.0
    %85 = vmatpush1.msra.mxu0 0.0
    %86 = vmatprep.subr.mxu0 0.0
    %87 = vmatpush1.msra.mxu0 0.0
    %88 = vmatprep.subr.mxu0 0.0
    %89 = vmatpush1.msra.mxu0 0.0
    %90 = vmatprep.subr.mxu0 0.0
    %91 = vmatpush1.msra.mxu0 0.0
    %92 = vmatprep.subr.mxu0 0.0
    %93 = vmatpush1.msra.mxu0 0.0
    %94 = vmatprep.subr.mxu0 0.0
    %95 = vmatpush1.msra.mxu0 0.0
    %96 = vmatprep.subr.mxu0 0.0
    %97 = vmatpush1.msra.mxu0 0.0
    %98 = vmatprep.subr.mxu0 0.0
    %99 = vmatpush1.msra.mxu0 0.0
    %100 = vmatprep.subr.mxu0 0.0
    %101 = vmatpush1.msra.mxu0 0.0
    %102 = vmatprep.subr.mxu0 0.0
    %103 = vmatpush1.msra.mxu0 0.0
    %104 = vmatprep.subr.mxu0 0.0
    %105 = vmatpush1.msra.mxu0 0.0
    %106 = vmatprep.subr.mxu0 0.0
    %107 = vmatpush1.msra.mxu0 0.0
    %108 = vmatprep.subr.mxu0 0.0
    %109 = vmatpush1.msra.mxu0 0.0
    %110 = vmatprep.subr.mxu0 0.0
    %111 = vmatpush1.msra.mxu0 0.0
    %112 = vmatprep.subr.mxu0 0.0
    %113 = vmatpush1.msra.mxu0 0.0
    %114 = vmatprep.subr.mxu0 0.0
    %115 = vmatpush1.msra.mxu0 0.0
    %116 = vmatprep.subr.mxu0 0.0
    %117 = vmatpush1.msra.mxu0 0.0
    %118 = vmatprep.subr.mxu0 0.0
    %119 = vmatpush1.msra.mxu0 0.0
    %120 = vmatprep.subr.mxu0 0.0
    %121 = vmatpush1.msra.mxu0 0.0
    %122 = vmatprep.subr.mxu0 0.0
    %123 = vmatpush1.msra.mxu0 0.0
    %124 = vmatprep.subr.mxu0 0.0
    %125 = vmatpush1.msra.mxu0 0.0
    %126 = vmatprep.subr.mxu0 0.0
    %127 = vmatpush1.msra.mxu0 0.0
    %128 = vmatprep.subr.mxu0 0.0
    %129 = vmatpush1.msra.mxu0 0.0
    %130 = vmatprep.mubr.f32.mxu0 0.0
    %131 = vmatmul.mubr.f32.gmra.mrb[0].mxu0 %v43
    %v132 = vpop.f32.mrb[0].mxu0
    %v133 = vadd.f32 %v39, %v132
    %v134 = vpop.f32.mrb[0].mxu0
    %135 = vmatprep.mubr.f32.mxu0 0.0
    %136 = vmatmul.mubr.f32.gmra.mrb[0].mxu0 %v46
    %v137 = vpop.f32.mrb[0].mxu0
    %v138 = vadd.f32 %v39, %v137
    %v139 = vpop.f32.mrb[0].mxu0
    %140 = vmatprep.mubr.f32.mxu0 0.0
    %141 = vmatmul.mubr.f32.gmra.mrb[0].mxu0 %v49
    %v142 = vpop.f32.mrb[0].mxu0
    %v143 = vadd.f32 %v39, %v142
    %v144 = vpop.f32.mrb[0].mxu0
    %145 = vmatprep.mubr.f32.mxu0 0.0
    %146 = vmatmul.mubr.f32.gmra.mrb[0].mxu0 %v52
    %v147 = vpop.f32.mrb[0].mxu0
    %v148 = vadd.f32 %v39, %v147
    %v149 = vpop.f32.mrb[0].mxu0
    %150 = vmatprep.mubr.f32.mxu0 0.0
    %151 = vmatmul.mubr.f32.gmra.mrb[0].mxu0 %v55
    %v152 = vpop.f32.mrb[0].mxu0
    %v153 = vadd.f32 %v39, %v152
    %v154 = vpop.f32.mrb[0].mxu0
    %155 = vmatprep.mubr.f32.mxu0 0.0
    %156 = vmatmul.mubr.f32.gmra.mrb[0].mxu0 %v58
    %v157 = vpop.f32.mrb[0].mxu0
    %v158 = vadd.f32 %v39, %v157
    %v159 = vpop.f32.mrb[0].mxu0
    %160 = vmatprep.mubr.f32.mxu0 0.0
    %161 = vmatmul.mubr.f32.gmra.mrb[0].mxu0 %v61
    %v162 = vpop.f32.mrb[0].mxu0
    %v163 = vadd.f32 %v39, %v162
    %v164 = vpop.f32.mrb[0].mxu0
    %165 = vmatprep.mubr.f32.mxu0 0.0
    %166 = vmatmul.mubr.f32.gmra.mrb[0].mxu0 %v64
    %v167 = vpop.f32.mrb[0].mxu0
    %v168 = vadd.f32 %v39, %v167
    %v169 = vpop.f32.mrb[0].mxu0
    %170 = vdwg.mxu0
    %v171 = vld [vmem:[%s2] sm:$0xff]
    %v172 = vld [vmem:[%s2 + $0x8] sm:$0xff]
    %v173 = vld [vmem:[%s2 + $0x10] sm:$0xff]
    %v174 = vld [vmem:[%s2 + $0x18] sm:$0xff]
    %vm175 = vcmask 261120
    %v177 = vsel %vm175, 0.0, 0
    %179 = vmatprep.subr.mxu0 0.0
    %180 = vmatpush1.msra.mxu0 %v171
    %181 = vmatprep.subr.mxu0 0.0
    %182 = vmatpush1.msra.mxu0 %v172
    %183 = vmatprep.subr.mxu0 0.0
    %184 = vmatpush1.msra.mxu0 %v173
    %185 = vmatprep.subr.mxu0 0.0
    %186 = vmatpush1.msra.mxu0 %v174
    %187 = vmatprep.subr.mxu0 0.0
    %188 = vmatpush1.msra.mxu0 0.0
    %189 = vmatprep.subr.mxu0 0.0
    %190 = vmatpush1.msra.mxu0 0.0
    %191 = vmatprep.subr.mxu0 0.0
    %192 = vmatpush1.msra.mxu0 0.0
    %193 = vmatprep.subr.mxu0 0.0
    %194 = vmatpush1.msra.mxu0 0.0
    %195 = vmatprep.subr.mxu0 0.0
    %196 = vmatpush1.msra.mxu0 0.0
    %197 = vmatprep.subr.mxu0 0.0
    %198 = vmatpush1.msra.mxu0 0.0
    %199 = vmatprep.subr.mxu0 0.0
    %200 = vmatpush1.msra.mxu0 0.0
    %201 = vmatprep.subr.mxu0 0.0
    %202 = vmatpush1.msra.mxu0 0.0
    %203 = vmatprep.subr.mxu0 0.0
    %204 = vmatpush1.msra.mxu0 0.0
    %205 = vmatprep.subr.mxu0 0.0
    %206 = vmatpush1.msra.mxu0 0.0
    %207 = vmatprep.subr.mxu0 0.0
    %208 = vmatpush1.msra.mxu0 0.0
    %209 = vmatprep.subr.mxu0 0.0
    %210 = vmatpush1.msra.mxu0 0.0
    %211 = vmatprep.subr.mxu0 0.0
    %212 = vmatpush1.msra.mxu0 0.0
    %213 = vmatprep.subr.mxu0 0.0
    %214 = vmatpush1.msra.mxu0 0.0
    %215 = vmatprep.subr.mxu0 0.0
    %216 = vmatpush1.msra.mxu0 0.0
    %217 = vmatprep.subr.mxu0 0.0
    %218 = vmatpush1.msra.mxu0 0.0
    %219 = vmatprep.subr.mxu0 0.0
    %220 = vmatpush1.msra.mxu0 0.0
    %221 = vmatprep.subr.mxu0 0.0
    %222 = vmatpush1.msra.mxu0 0.0
    %223 = vmatprep.subr.mxu0 0.0
    %224 = vmatpush1.msra.mxu0 0.0
    %225 = vmatprep.subr.mxu0 0.0
    %226 = vmatpush1.msra.mxu0 0.0
    %227 = vmatprep.subr.mxu0 0.0
    %228 = vmatpush1.msra.mxu0 0.0
    %229 = vmatprep.subr.mxu0 0.0
    %230 = vmatpush1.msra.mxu0 0.0
    %231 = vmatprep.subr.mxu0 0.0
    %232 = vmatpush1.msra.mxu0 0.0
    %233 = vmatprep.subr.mxu0 0.0
    %234 = vmatpush1.msra.mxu0 0.0
    %235 = vmatprep.subr.mxu0 0.0
    %236 = vmatpush1.msra.mxu0 0.0
    %237 = vmatprep.subr.mxu0 0.0
    %238 = vmatpush1.msra.mxu0 0.0
    %239 = vmatprep.subr.mxu0 0.0
    %240 = vmatpush1.msra.mxu0 0.0
    %241 = vmatprep.subr.mxu0 0.0
    %242 = vmatpush1.msra.mxu0 0.0
    %243 = vmatprep.mubr.f32.mxu0 0.0
    %244 = vmatmul.mubr.f32.gmra.mrb[0].mxu0 %v177
    %v245 = vpop.f32.mrb[0].mxu0
    %v246 = vadd.f32 0.0, %v245
    %v247 = vpop.f32.mrb[0].mxu0
    %248 = vdwg.mxu0
    %v249 = vadd.f32 %v133, %v246
    %v250 = vxor.u32 %v249, 2147483648
    %v251 = vmul.f32 %v250, 1.442695
    %v252 = vpow.pop %v251
    %v253 = vadd.f32 %v252, 1.0
    %v254 = vrcp.pop %v253
    %v255 = vmul.f32 1.0, %v254
    %v256 = vtanh.pop %v249
    %v257 = vmul.f32 %v255, 0.0
    %259 = vrot.lane.b32.xlu0 %v256, 96
    %v260 = vpop.permute.xlu0 %259
    %v262 = vmul.f32 %v255, %v260
    %264 = vrot.lane.b32.xlu0 %v262, 96
    %v265 = vpop.permute.xlu0 %264
    %v267 = vadd.f32 %v257, %v265
    %v268 = vtanh.pop %v267
    %270 = vrot.lane.b32.xlu0 %v268, 96
    %v271 = vpop.permute.xlu0 %270
    %v273 = vmul.f32 %v255, %v271
    %275 = vrot.lane.b32.xlu0 %v273, 32
    %v276 = vpop.permute.xlu0 %275
    %v277 = vsel %vm175, %v276, 0
    %279 = vmatprep.subr.mxu0 0.0
    %280 = vmatpush1.msra.mxu0 %v171
    %281 = vmatprep.subr.mxu0 0.0
    %282 = vmatpush1.msra.mxu0 %v172
    %283 = vmatprep.subr.mxu0 0.0
    %284 = vmatpush1.msra.mxu0 %v173
    %285 = vmatprep.subr.mxu0 0.0
    %286 = vmatpush1.msra.mxu0 %v174
    %287 = vmatprep.subr.mxu0 0.0
    %288 = vmatpush1.msra.mxu0 0.0
    %289 = vmatprep.subr.mxu0 0.0
    %290 = vmatpush1.msra.mxu0 0.0
    %291 = vmatprep.subr.mxu0 0.0
    %292 = vmatpush1.msra.mxu0 0.0
    %293 = vmatprep.subr.mxu0 0.0
    %294 = vmatpush1.msra.mxu0 0.0
    %295 = vmatprep.subr.mxu0 0.0
    %296 = vmatpush1.msra.mxu0 0.0
    %297 = vmatprep.subr.mxu0 0.0
    %298 = vmatpush1.msra.mxu0 0.0
    %299 = vmatprep.subr.mxu0 0.0
    %300 = vmatpush1.msra.mxu0 0.0
    %301 = vmatprep.subr.mxu0 0.0
    %302 = vmatpush1.msra.mxu0 0.0
    %303 = vmatprep.subr.mxu0 0.0
    %304 = vmatpush1.msra.mxu0 0.0
    %305 = vmatprep.subr.mxu0 0.0
    %306 = vmatpush1.msra.mxu0 0.0
    %307 = vmatprep.subr.mxu0 0.0
    %308 = vmatpush1.msra.mxu0 0.0
    %309 = vmatprep.subr.mxu0 0.0
    %310 = vmatpush1.msra.mxu0 0.0
    %311 = vmatprep.subr.mxu0 0.0
    %312 = vmatpush1.msra.mxu0 0.0
    %313 = vmatprep.subr.mxu0 0.0
    %314 = vmatpush1.msra.mxu0 0.0
    %315 = vmatprep.subr.mxu0 0.0
    %316 = vmatpush1.msra.mxu0 0.0
    %317 = vmatprep.subr.mxu0 0.0
    %318 = vmatpush1.msra.mxu0 0.0
    %319 = vmatprep.subr.mxu0 0.0
    %320 = vmatpush1.msra.mxu0 0.0
    %321 = vmatprep.subr.mxu0 0.0
    %322 = vmatpush1.msra.mxu0 0.0
    %323 = vmatprep.subr.mxu0 0.0
    %324 = vmatpush1.msra.mxu0 0.0
    %325 = vmatprep.subr.mxu0 0.0
    %326 = vmatpush1.msra.mxu0 0.0
    %327 = vmatprep.subr.mxu0 0.0
    %328 = vmatpush1.msra.mxu0 0.0
    %329 = vmatprep.subr.mxu0 0.0
    %330 = vmatpush1.msra.mxu0 0.0
    %331 = vmatprep.subr.mxu0 0.0
    %332 = vmatpush1.msra.mxu0 0.0
    %333 = vmatprep.subr.mxu0 0.0
    %334 = vmatpush1.msra.mxu0 0.0
    %335 = vmatprep.subr.mxu0 0.0
    %336 = vmatpush1.msra.mxu0 0.0
    %337 = vmatprep.subr.mxu0 0.0
    %338 = vmatpush1.msra.mxu0 0.0
    %339 = vmatprep.subr.mxu0 0.0
    %340 = vmatpush1.msra.mxu0 0.0
    %341 = vmatprep.subr.mxu0 0.0
    %342 = vmatpush1.msra.mxu0 0.0
    %343 = vmatprep.mubr.f32.mxu0 0.0
    %344 = vmatmul.mubr.f32.gmra.mrb[0].mxu0 %v277
    %v345 = vpop.f32.mrb[0].mxu0
    %v346 = vadd.f32 0.0, %v345
    %v347 = vpop.f32.mrb[0].mxu0
    %348 = vdwg.mxu0
    %v349 = vadd.f32 %v138, %v346
    %v350 = vxor.u32 %v349, 2147483648
    %v351 = vmul.f32 %v350, 1.442695
    %v352 = vpow.pop %v351
    %v353 = vadd.f32 %v352, 1.0
    %v354 = vrcp.pop %v353
    %v355 = vmul.f32 1.0, %v354
    %v356 = vtanh.pop %v349
    %v357 = vmul.f32 %v355, %v267
    %359 = vrot.lane.b32.xlu0 %v356, 96
    %v360 = vpop.permute.xlu0 %359
    %v362 = vmul.f32 %v355, %v360
    %364 = vrot.lane.b32.xlu0 %v362, 96
    %v365 = vpop.permute.xlu0 %364
    %v367 = vadd.f32 %v357, %v365
    %v368 = vtanh.pop %v367
    %370 = vrot.lane.b32.xlu0 %v368, 96
    %v371 = vpop.permute.xlu0 %370
    %v373 = vmul.f32 %v355, %v371
    %375 = vrot.lane.b32.xlu0 %v373, 32
    %v376 = vpop.permute.xlu0 %375
    %v377 = vsel %vm175, %v376, 0
    %379 = vmatprep.subr.mxu0 0.0
    %380 = vmatpush1.msra.mxu0 %v171
    %381 = vmatprep.subr.mxu0 0.0
    %382 = vmatpush1.msra.mxu0 %v172
    %383 = vmatprep.subr.mxu0 0.0
    %384 = vmatpush1.msra.mxu0 %v173
    %385 = vmatprep.subr.mxu0 0.0
    %386 = vmatpush1.msra.mxu0 %v174
    %387 = vmatprep.subr.mxu0 0.0
    %388 = vmatpush1.msra.mxu0 0.0
    %389 = vmatprep.subr.mxu0 0.0
    %390 = vmatpush1.msra.mxu0 0.0
    %391 = vmatprep.subr.mxu0 0.0
    %392 = vmatpush1.msra.mxu0 0.0
    %393 = vmatprep.subr.mxu0 0.0
    %394 = vmatpush1.msra.mxu0 0.0
    %395 = vmatprep.subr.mxu0 0.0
    %396 = vmatpush1.msra.mxu0 0.0
    %397 = vmatprep.subr.mxu0 0.0
    %398 = vmatpush1.msra.mxu0 0.0
    %399 = vmatprep.subr.mxu0 0.0
    %400 = vmatpush1.msra.mxu0 0.0
    %401 = vmatprep.subr.mxu0 0.0
    %402 = vmatpush1.msra.mxu0 0.0
    %403 = vmatprep.subr.mxu0 0.0
    %404 = vmatpush1.msra.mxu0 0.0
    %405 = vmatprep.subr.mxu0 0.0
    %406 = vmatpush1.msra.mxu0 0.0
    %407 = vmatprep.subr.mxu0 0.0
    %408 = vmatpush1.msra.mxu0 0.0
    %409 = vmatprep.subr.mxu0 0.0
    %410 = vmatpush1.msra.mxu0 0.0
    %411 = vmatprep.subr.mxu0 0.0
    %412 = vmatpush1.msra.mxu0 0.0
    %413 = vmatprep.subr.mxu0 0.0
    %414 = vmatpush1.msra.mxu0 0.0
    %415 = vmatprep.subr.mxu0 0.0
    %416 = vmatpush1.msra.mxu0 0.0
    %417 = vmatprep.subr.mxu0 0.0
    %418 = vmatpush1.msra.mxu0 0.0
    %419 = vmatprep.subr.mxu0 0.0
    %420 = vmatpush1.msra.mxu0 0.0
    %421 = vmatprep.subr.mxu0 0.0
    %422 = vmatpush1.msra.mxu0 0.0
    %423 = vmatprep.subr.mxu0 0.0
    %424 = vmatpush1.msra.mxu0 0.0
    %425 = vmatprep.subr.mxu0 0.0
    %426 = vmatpush1.msra.mxu0 0.0
    %427 = vmatprep.subr.mxu0 0.0
    %428 = vmatpush1.msra.mxu0 0.0
    %429 = vmatprep.subr.mxu0 0.0
    %430 = vmatpush1.msra.mxu0 0.0
    %431 = vmatprep.subr.mxu0 0.0
    %432 = vmatpush1.msra.mxu0 0.0
    %433 = vmatprep.subr.mxu0 0.0
    %434 = vmatpush1.msra.mxu0 0.0
    %435 = vmatprep.subr.mxu0 0.0
    %436 = vmatpush1.msra.mxu0 0.0
    %437 = vmatprep.subr.mxu0 0.0
    %438 = vmatpush1.msra.mxu0 0.0
    %439 = vmatprep.subr.mxu0 0.0
    %440 = vmatpush1.msra.mxu0 0.0
    %441 = vmatprep.subr.mxu0 0.0
    %442 = vmatpush1.msra.mxu0 0.0
    %443 = vmatprep.mubr.f32.mxu0 0.0
    %444 = vmatmul.mubr.f32.gmra.mrb[0].mxu0 %v377
    %v445 = vpop.f32.mrb[0].mxu0
    %v446 = vadd.f32 0.0, %v445
    %v447 = vpop.f32.mrb[0].mxu0
    %448 = vdwg.mxu0
    %v449 = vadd.f32 %v143, %v446
    %v450 = vxor.u32 %v449, 2147483648
    %v451 = vmul.f32 %v450, 1.442695
    %v452 = vpow.pop %v451
    %v453 = vadd.f32 %v452, 1.0
    %v454 = vrcp.pop %v453
    %v455 = vmul.f32 1.0, %v454
    %v456 = vtanh.pop %v449
    %v457 = vmul.f32 %v455, %v367
    %459 = vrot.lane.b32.xlu0 %v456, 96
    %v460 = vpop.permute.xlu0 %459
    %v462 = vmul.f32 %v455, %v460
    %464 = vrot.lane.b32.xlu0 %v462, 96
    %v465 = vpop.permute.xlu0 %464
    %v467 = vadd.f32 %v457, %v465
    %v468 = vtanh.pop %v467
    %470 = vrot.lane.b32.xlu0 %v468, 96
    %v471 = vpop.permute.xlu0 %470
    %v473 = vmul.f32 %v455, %v471
    %475 = vrot.lane.b32.xlu0 %v473, 32
    %v476 = vpop.permute.xlu0 %475
    %v477 = vsel %vm175, %v476, 0
    %479 = vmatprep.subr.mxu0 0.0
    %480 = vmatpush1.msra.mxu0 %v171
    %481 = vmatprep.subr.mxu0 0.0
    %482 = vmatpush1.msra.mxu0 %v172
    %483 = vmatprep.subr.mxu0 0.0
    %484 = vmatpush1.msra.mxu0 %v173
    %485 = vmatprep.subr.mxu0 0.0
    %486 = vmatpush1.msra.mxu0 %v174
    %487 = vmatprep.subr.mxu0 0.0
    %488 = vmatpush1.msra.mxu0 0.0
    %489 = vmatprep.subr.mxu0 0.0
    %490 = vmatpush1.msra.mxu0 0.0
    %491 = vmatprep.subr.mxu0 0.0
    %492 = vmatpush1.msra.mxu0 0.0
    %493 = vmatprep.subr.mxu0 0.0
    %494 = vmatpush1.msra.mxu0 0.0
    %495 = vmatprep.subr.mxu0 0.0
    %496 = vmatpush1.msra.mxu0 0.0
    %497 = vmatprep.subr.mxu0 0.0
    %498 = vmatpush1.msra.mxu0 0.0
    %499 = vmatprep.subr.mxu0 0.0
    %500 = vmatpush1.msra.mxu0 0.0
    %501 = vmatprep.subr.mxu0 0.0
    %502 = vmatpush1.msra.mxu0 0.0
    %503 = vmatprep.subr.mxu0 0.0
    %504 = vmatpush1.msra.mxu0 0.0
    %505 = vmatprep.subr.mxu0 0.0
    %506 = vmatpush1.msra.mxu0 0.0
    %507 = vmatprep.subr.mxu0 0.0
    %508 = vmatpush1.msra.mxu0 0.0
    %509 = vmatprep.subr.mxu0 0.0
    %510 = vmatpush1.msra.mxu0 0.0
    %511 = vmatprep.subr.mxu0 0.0
    %512 = vmatpush1.msra.mxu0 0.0
    %513 = vmatprep.subr.mxu0 0.0
    %514 = vmatpush1.msra.mxu0 0.0
    %515 = vmatprep.subr.mxu0 0.0
    %516 = vmatpush1.msra.mxu0 0.0
    %517 = vmatprep.subr.mxu0 0.0
    %518 = vmatpush1.msra.mxu0 0.0
    %519 = vmatprep.subr.mxu0 0.0
    %520 = vmatpush1.msra.mxu0 0.0
    %521 = vmatprep.subr.mxu0 0.0
    %522 = vmatpush1.msra.mxu0 0.0
    %523 = vmatprep.subr.mxu0 0.0
    %524 = vmatpush1.msra.mxu0 0.0
    %525 = vmatprep.subr.mxu0 0.0
    %526 = vmatpush1.msra.mxu0 0.0
    %527 = vmatprep.subr.mxu0 0.0
    %528 = vmatpush1.msra.mxu0 0.0
    %529 = vmatprep.subr.mxu0 0.0
    %530 = vmatpush1.msra.mxu0 0.0
    %531 = vmatprep.subr.mxu0 0.0
    %532 = vmatpush1.msra.mxu0 0.0
    %533 = vmatprep.subr.mxu0 0.0
    %534 = vmatpush1.msra.mxu0 0.0
    %535 = vmatprep.subr.mxu0 0.0
    %536 = vmatpush1.msra.mxu0 0.0
    %537 = vmatprep.subr.mxu0 0.0
    %538 = vmatpush1.msra.mxu0 0.0
    %539 = vmatprep.subr.mxu0 0.0
    %540 = vmatpush1.msra.mxu0 0.0
    %541 = vmatprep.subr.mxu0 0.0
    %542 = vmatpush1.msra.mxu0 0.0
    %543 = vmatprep.mubr.f32.mxu0 0.0
    %544 = vmatmul.mubr.f32.gmra.mrb[0].mxu0 %v477
    %v545 = vpop.f32.mrb[0].mxu0
    %v546 = vadd.f32 0.0, %v545
    %v547 = vpop.f32.mrb[0].mxu0
    %548 = vdwg.mxu0
    %v549 = vadd.f32 %v148, %v546
    %v550 = vxor.u32 %v549, 2147483648
    %v551 = vmul.f32 %v550, 1.442695
    %v552 = vpow.pop %v551
    %v553 = vadd.f32 %v552, 1.0
    %v554 = vrcp.pop %v553
    %v555 = vmul.f32 1.0, %v554
    %v556 = vtanh.pop %v549
    %v557 = vmul.f32 %v555, %v467
    %559 = vrot.lane.b32.xlu0 %v556, 96
    %v560 = vpop.permute.xlu0 %559
    %v562 = vmul.f32 %v555, %v560
    %564 = vrot.lane.b32.xlu0 %v562, 96
    %v565 = vpop.permute.xlu0 %564
    %v567 = vadd.f32 %v557, %v565
    %v568 = vtanh.pop %v567
    %570 = vrot.lane.b32.xlu0 %v568, 96
    %v571 = vpop.permute.xlu0 %570
    %v573 = vmul.f32 %v555, %v571
    %575 = vrot.lane.b32.xlu0 %v573, 32
    %v576 = vpop.permute.xlu0 %575
    %v577 = vsel %vm175, %v576, 0
    %579 = vmatprep.subr.mxu0 0.0
    %580 = vmatpush1.msra.mxu0 %v171
    %581 = vmatprep.subr.mxu0 0.0
    %582 = vmatpush1.msra.mxu0 %v172
    %583 = vmatprep.subr.mxu0 0.0
    %584 = vmatpush1.msra.mxu0 %v173
    %585 = vmatprep.subr.mxu0 0.0
    %586 = vmatpush1.msra.mxu0 %v174
    %587 = vmatprep.subr.mxu0 0.0
    %588 = vmatpush1.msra.mxu0 0.0
    %589 = vmatprep.subr.mxu0 0.0
    %590 = vmatpush1.msra.mxu0 0.0
    %591 = vmatprep.subr.mxu0 0.0
    %592 = vmatpush1.msra.mxu0 0.0
    %593 = vmatprep.subr.mxu0 0.0
    %594 = vmatpush1.msra.mxu0 0.0
    %595 = vmatprep.subr.mxu0 0.0
    %596 = vmatpush1.msra.mxu0 0.0
    %597 = vmatprep.subr.mxu0 0.0
    %598 = vmatpush1.msra.mxu0 0.0
    %599 = vmatprep.subr.mxu0 0.0
    %600 = vmatpush1.msra.mxu0 0.0
    %601 = vmatprep.subr.mxu0 0.0
    %602 = vmatpush1.msra.mxu0 0.0
    %603 = vmatprep.subr.mxu0 0.0
    %604 = vmatpush1.msra.mxu0 0.0
    %605 = vmatprep.subr.mxu0 0.0
    %606 = vmatpush1.msra.mxu0 0.0
    %607 = vmatprep.subr.mxu0 0.0
    %608 = vmatpush1.msra.mxu0 0.0
    %609 = vmatprep.subr.mxu0 0.0
    %610 = vmatpush1.msra.mxu0 0.0
    %611 = vmatprep.subr.mxu0 0.0
    %612 = vmatpush1.msra.mxu0 0.0
    %613 = vmatprep.subr.mxu0 0.0
    %614 = vmatpush1.msra.mxu0 0.0
    %615 = vmatprep.subr.mxu0 0.0
    %616 = vmatpush1.msra.mxu0 0.0
    %617 = vmatprep.subr.mxu0 0.0
    %618 = vmatpush1.msra.mxu0 0.0
    %619 = vmatprep.subr.mxu0 0.0
    %620 = vmatpush1.msra.mxu0 0.0
    %621 = vmatprep.subr.mxu0 0.0
    %622 = vmatpush1.msra.mxu0 0.0
    %623 = vmatprep.subr.mxu0 0.0
    %624 = vmatpush1.msra.mxu0 0.0
    %625 = vmatprep.subr.mxu0 0.0
    %626 = vmatpush1.msra.mxu0 0.0
    %627 = vmatprep.subr.mxu0 0.0
    %628 = vmatpush1.msra.mxu0 0.0
    %629 = vmatprep.subr.mxu0 0.0
    %630 = vmatpush1.msra.mxu0 0.0
    %631 = vmatprep.subr.mxu0 0.0
    %632 = vmatpush1.msra.mxu0 0.0
    %633 = vmatprep.subr.mxu0 0.0
    %634 = vmatpush1.msra.mxu0 0.0
    %635 = vmatprep.subr.mxu0 0.0
    %636 = vmatpush1.msra.mxu0 0.0
    %637 = vmatprep.subr.mxu0 0.0
    %638 = vmatpush1.msra.mxu0 0.0
    %639 = vmatprep.subr.mxu0 0.0
    %640 = vmatpush1.msra.mxu0 0.0
    %641 = vmatprep.subr.mxu0 0.0
    %642 = vmatpush1.msra.mxu0 0.0
    %643 = vmatprep.mubr.f32.mxu0 0.0
    %644 = vmatmul.mubr.f32.gmra.mrb[0].mxu0 %v577
    %v645 = vpop.f32.mrb[0].mxu0
    %v646 = vadd.f32 0.0, %v645
    %v647 = vpop.f32.mrb[0].mxu0
    %648 = vdwg.mxu0
    %v649 = vadd.f32 %v153, %v646
    %v650 = vxor.u32 %v649, 2147483648
    %v651 = vmul.f32 %v650, 1.442695
    %v652 = vpow.pop %v651
    %v653 = vadd.f32 %v652, 1.0
    %v654 = vrcp.pop %v653
    %v655 = vmul.f32 1.0, %v654
    %v656 = vtanh.pop %v649
    %v657 = vmul.f32 %v655, %v567
    %659 = vrot.lane.b32.xlu0 %v656, 96
    %v660 = vpop.permute.xlu0 %659
    %v662 = vmul.f32 %v655, %v660
    %664 = vrot.lane.b32.xlu0 %v662, 96
    %v665 = vpop.permute.xlu0 %664
    %v667 = vadd.f32 %v657, %v665
    %v668 = vtanh.pop %v667
    %670 = vrot.lane.b32.xlu0 %v668, 96
    %v671 = vpop.permute.xlu0 %670
    %v673 = vmul.f32 %v655, %v671
    %675 = vrot.lane.b32.xlu0 %v673, 32
    %v676 = vpop.permute.xlu0 %675
    %v677 = vsel %vm175, %v676, 0
    %679 = vmatprep.subr.mxu0 0.0
    %680 = vmatpush1.msra.mxu0 %v171
    %681 = vmatprep.subr.mxu0 0.0
    %682 = vmatpush1.msra.mxu0 %v172
    %683 = vmatprep.subr.mxu0 0.0
    %684 = vmatpush1.msra.mxu0 %v173
    %685 = vmatprep.subr.mxu0 0.0
    %686 = vmatpush1.msra.mxu0 %v174
    %687 = vmatprep.subr.mxu0 0.0
    %688 = vmatpush1.msra.mxu0 0.0
    %689 = vmatprep.subr.mxu0 0.0
    %690 = vmatpush1.msra.mxu0 0.0
    %691 = vmatprep.subr.mxu0 0.0
    %692 = vmatpush1.msra.mxu0 0.0
    %693 = vmatprep.subr.mxu0 0.0
    %694 = vmatpush1.msra.mxu0 0.0
    %695 = vmatprep.subr.mxu0 0.0
    %696 = vmatpush1.msra.mxu0 0.0
    %697 = vmatprep.subr.mxu0 0.0
    %698 = vmatpush1.msra.mxu0 0.0
    %699 = vmatprep.subr.mxu0 0.0
    %700 = vmatpush1.msra.mxu0 0.0
    %701 = vmatprep.subr.mxu0 0.0
    %702 = vmatpush1.msra.mxu0 0.0
    %703 = vmatprep.subr.mxu0 0.0
    %704 = vmatpush1.msra.mxu0 0.0
    %705 = vmatprep.subr.mxu0 0.0
    %706 = vmatpush1.msra.mxu0 0.0
    %707 = vmatprep.subr.mxu0 0.0
    %708 = vmatpush1.msra.mxu0 0.0
    %709 = vmatprep.subr.mxu0 0.0
    %710 = vmatpush1.msra.mxu0 0.0
    %711 = vmatprep.subr.mxu0 0.0
    %712 = vmatpush1.msra.mxu0 0.0
    %713 = vmatprep.subr.mxu0 0.0
    %714 = vmatpush1.msra.mxu0 0.0
    %715 = vmatprep.subr.mxu0 0.0
    %716 = vmatpush1.msra.mxu0 0.0
    %717 = vmatprep.subr.mxu0 0.0
    %718 = vmatpush1.msra.mxu0 0.0
    %719 = vmatprep.subr.mxu0 0.0
    %720 = vmatpush1.msra.mxu0 0.0
    %721 = vmatprep.subr.mxu0 0.0
    %722 = vmatpush1.msra.mxu0 0.0
    %723 = vmatprep.subr.mxu0 0.0
    %724 = vmatpush1.msra.mxu0 0.0
    %725 = vmatprep.subr.mxu0 0.0
    %726 = vmatpush1.msra.mxu0 0.0
    %727 = vmatprep.subr.mxu0 0.0
    %728 = vmatpush1.msra.mxu0 0.0
    %729 = vmatprep.subr.mxu0 0.0
    %730 = vmatpush1.msra.mxu0 0.0
    %731 = vmatprep.subr.mxu0 0.0
    %732 = vmatpush1.msra.mxu0 0.0
    %733 = vmatprep.subr.mxu0 0.0
    %734 = vmatpush1.msra.mxu0 0.0
    %735 = vmatprep.subr.mxu0 0.0
    %736 = vmatpush1.msra.mxu0 0.0
    %737 = vmatprep.subr.mxu0 0.0
    %738 = vmatpush1.msra.mxu0 0.0
    %739 = vmatprep.subr.mxu0 0.0
    %740 = vmatpush1.msra.mxu0 0.0
    %741 = vmatprep.subr.mxu0 0.0
    %742 = vmatpush1.msra.mxu0 0.0
    %743 = vmatprep.mubr.f32.mxu0 0.0
    %744 = vmatmul.mubr.f32.gmra.mrb[0].mxu0 %v677
    %v745 = vpop.f32.mrb[0].mxu0
    %v746 = vadd.f32 0.0, %v745
    %v747 = vpop.f32.mrb[0].mxu0
    %748 = vdwg.mxu0
    %v749 = vadd.f32 %v158, %v746
    %v750 = vxor.u32 %v749, 2147483648
    %v751 = vmul.f32 %v750, 1.442695
    %v752 = vpow.pop %v751
    %v753 = vadd.f32 %v752, 1.0
    %v754 = vrcp.pop %v753
    %v755 = vmul.f32 1.0, %v754
    %v756 = vtanh.pop %v749
    %v757 = vmul.f32 %v755, %v667
    %759 = vrot.lane.b32.xlu0 %v756, 96
    %v760 = vpop.permute.xlu0 %759
    %v762 = vmul.f32 %v755, %v760
    %764 = vrot.lane.b32.xlu0 %v762, 96
    %v765 = vpop.permute.xlu0 %764
    %v767 = vadd.f32 %v757, %v765
    %v768 = vtanh.pop %v767
    %770 = vrot.lane.b32.xlu0 %v768, 96
    %v771 = vpop.permute.xlu0 %770
    %v773 = vmul.f32 %v755, %v771
    %775 = vrot.lane.b32.xlu0 %v773, 32
    %v776 = vpop.permute.xlu0 %775
    %v777 = vsel %vm175, %v776, 0
    %779 = vmatprep.subr.mxu0 0.0
    %780 = vmatpush1.msra.mxu0 %v171
    %781 = vmatprep.subr.mxu0 0.0
    %782 = vmatpush1.msra.mxu0 %v172
    %783 = vmatprep.subr.mxu0 0.0
    %784 = vmatpush1.msra.mxu0 %v173
    %785 = vmatprep.subr.mxu0 0.0
    %786 = vmatpush1.msra.mxu0 %v174
    %787 = vmatprep.subr.mxu0 0.0
    %788 = vmatpush1.msra.mxu0 0.0
    %789 = vmatprep.subr.mxu0 0.0
    %790 = vmatpush1.msra.mxu0 0.0
    %791 = vmatprep.subr.mxu0 0.0
    %792 = vmatpush1.msra.mxu0 0.0
    %793 = vmatprep.subr.mxu0 0.0
    %794 = vmatpush1.msra.mxu0 0.0
    %795 = vmatprep.subr.mxu0 0.0
    %796 = vmatpush1.msra.mxu0 0.0
    %797 = vmatprep.subr.mxu0 0.0
    %798 = vmatpush1.msra.mxu0 0.0
    %799 = vmatprep.subr.mxu0 0.0
    %800 = vmatpush1.msra.mxu0 0.0
    %801 = vmatprep.subr.mxu0 0.0
    %802 = vmatpush1.msra.mxu0 0.0
    %803 = vmatprep.subr.mxu0 0.0
    %804 = vmatpush1.msra.mxu0 0.0
    %805 = vmatprep.subr.mxu0 0.0
    %806 = vmatpush1.msra.mxu0 0.0
    %807 = vmatprep.subr.mxu0 0.0
    %808 = vmatpush1.msra.mxu0 0.0
    %809 = vmatprep.subr.mxu0 0.0
    %810 = vmatpush1.msra.mxu0 0.0
    %811 = vmatprep.subr.mxu0 0.0
    %812 = vmatpush1.msra.mxu0 0.0
    %813 = vmatprep.subr.mxu0 0.0
    %814 = vmatpush1.msra.mxu0 0.0
    %815 = vmatprep.subr.mxu0 0.0
    %816 = vmatpush1.msra.mxu0 0.0
    %817 = vmatprep.subr.mxu0 0.0
    %818 = vmatpush1.msra.mxu0 0.0
    %819 = vmatprep.subr.mxu0 0.0
    %820 = vmatpush1.msra.mxu0 0.0
    %821 = vmatprep.subr.mxu0 0.0
    %822 = vmatpush1.msra.mxu0 0.0
    %823 = vmatprep.subr.mxu0 0.0
    %824 = vmatpush1.msra.mxu0 0.0
    %825 = vmatprep.subr.mxu0 0.0
    %826 = vmatpush1.msra.mxu0 0.0
    %827 = vmatprep.subr.mxu0 0.0
    %828 = vmatpush1.msra.mxu0 0.0
    %829 = vmatprep.subr.mxu0 0.0
    %830 = vmatpush1.msra.mxu0 0.0
    %831 = vmatprep.subr.mxu0 0.0
    %832 = vmatpush1.msra.mxu0 0.0
    %833 = vmatprep.subr.mxu0 0.0
    %834 = vmatpush1.msra.mxu0 0.0
    %835 = vmatprep.subr.mxu0 0.0
    %836 = vmatpush1.msra.mxu0 0.0
    %837 = vmatprep.subr.mxu0 0.0
    %838 = vmatpush1.msra.mxu0 0.0
    %839 = vmatprep.subr.mxu0 0.0
    %840 = vmatpush1.msra.mxu0 0.0
    %841 = vmatprep.subr.mxu0 0.0
    %842 = vmatpush1.msra.mxu0 0.0
    %843 = vmatprep.mubr.f32.mxu0 0.0
    %844 = vmatmul.mubr.f32.gmra.mrb[0].mxu0 %v777
    %v845 = vpop.f32.mrb[0].mxu0
    %v846 = vadd.f32 0.0, %v845
    %v847 = vpop.f32.mrb[0].mxu0
    %848 = vdwg.mxu0
    %v849 = vadd.f32 %v163, %v846
    %v850 = vxor.u32 %v849, 2147483648
    %v851 = vmul.f32 %v850, 1.442695
    %v852 = vpow.pop %v851
    %v853 = vadd.f32 %v852, 1.0
    %v854 = vrcp.pop %v853
    %v855 = vmul.f32 1.0, %v854
    %v856 = vtanh.pop %v849
    %v857 = vmul.f32 %v855, %v767
    %859 = vrot.lane.b32.xlu0 %v856, 96
    %v860 = vpop.permute.xlu0 %859
    %v862 = vmul.f32 %v855, %v860
    %864 = vrot.lane.b32.xlu0 %v862, 96
    %v865 = vpop.permute.xlu0 %864
    %v867 = vadd.f32 %v857, %v865
    %v868 = vtanh.pop %v867
    %870 = vrot.lane.b32.xlu0 %v868, 96
    %v871 = vpop.permute.xlu0 %870
    %v873 = vmul.f32 %v855, %v871
    %875 = vrot.lane.b32.xlu0 %v873, 32
    %v876 = vpop.permute.xlu0 %875
    %v877 = vsel %vm175, %v876, 0
    %879 = vmatprep.subr.mxu0 0.0
    %880 = vmatpush1.msra.mxu0 %v171
    %881 = vmatprep.subr.mxu0 0.0
    %882 = vmatpush1.msra.mxu0 %v172
    %883 = vmatprep.subr.mxu0 0.0
    %884 = vmatpush1.msra.mxu0 %v173
    %885 = vmatprep.subr.mxu0 0.0
    %886 = vmatpush1.msra.mxu0 %v174
    %887 = vmatprep.subr.mxu0 0.0
    %888 = vmatpush1.msra.mxu0 0.0
    %889 = vmatprep.subr.mxu0 0.0
    %890 = vmatpush1.msra.mxu0 0.0
    %891 = vmatprep.subr.mxu0 0.0
    %892 = vmatpush1.msra.mxu0 0.0
    %893 = vmatprep.subr.mxu0 0.0
    %894 = vmatpush1.msra.mxu0 0.0
    %895 = vmatprep.subr.mxu0 0.0
    %896 = vmatpush1.msra.mxu0 0.0
    %897 = vmatprep.subr.mxu0 0.0
    %898 = vmatpush1.msra.mxu0 0.0
    %899 = vmatprep.subr.mxu0 0.0
    %900 = vmatpush1.msra.mxu0 0.0
    %901 = vmatprep.subr.mxu0 0.0
    %902 = vmatpush1.msra.mxu0 0.0
    %903 = vmatprep.subr.mxu0 0.0
    %904 = vmatpush1.msra.mxu0 0.0
    %905 = vmatprep.subr.mxu0 0.0
    %906 = vmatpush1.msra.mxu0 0.0
    %907 = vmatprep.subr.mxu0 0.0
    %908 = vmatpush1.msra.mxu0 0.0
    %909 = vmatprep.subr.mxu0 0.0
    %910 = vmatpush1.msra.mxu0 0.0
    %911 = vmatprep.subr.mxu0 0.0
    %912 = vmatpush1.msra.mxu0 0.0
    %913 = vmatprep.subr.mxu0 0.0
    %914 = vmatpush1.msra.mxu0 0.0
    %915 = vmatprep.subr.mxu0 0.0
    %916 = vmatpush1.msra.mxu0 0.0
    %917 = vmatprep.subr.mxu0 0.0
    %918 = vmatpush1.msra.mxu0 0.0
    %919 = vmatprep.subr.mxu0 0.0
    %920 = vmatpush1.msra.mxu0 0.0
    %921 = vmatprep.subr.mxu0 0.0
    %922 = vmatpush1.msra.mxu0 0.0
    %923 = vmatprep.subr.mxu0 0.0
    %924 = vmatpush1.msra.mxu0 0.0
    %925 = vmatprep.subr.mxu0 0.0
    %926 = vmatpush1.msra.mxu0 0.0
    %927 = vmatprep.subr.mxu0 0.0
    %928 = vmatpush1.msra.mxu0 0.0
    %929 = vmatprep.subr.mxu0 0.0
    %930 = vmatpush1.msra.mxu0 0.0
    %931 = vmatprep.subr.mxu0 0.0
    %932 = vmatpush1.msra.mxu0 0.0
    %933 = vmatprep.subr.mxu0 0.0
    %934 = vmatpush1.msra.mxu0 0.0
    %935 = vmatprep.subr.mxu0 0.0
    %936 = vmatpush1.msra.mxu0 0.0
    %937 = vmatprep.subr.mxu0 0.0
    %938 = vmatpush1.msra.mxu0 0.0
    %939 = vmatprep.subr.mxu0 0.0
    %940 = vmatpush1.msra.mxu0 0.0
    %941 = vmatprep.subr.mxu0 0.0
    %942 = vmatpush1.msra.mxu0 0.0
    %943 = vmatprep.mubr.f32.mxu0 0.0
    %944 = vmatmul.mubr.f32.gmra.mrb[0].mxu0 %v877
    %v945 = vpop.f32.mrb[0].mxu0
    %v946 = vadd.f32 0.0, %v945
    %v947 = vpop.f32.mrb[0].mxu0
    %948 = vdwg.mxu0
    %v949 = vadd.f32 %v168, %v946
    %v950 = vxor.u32 %v949, 2147483648
    %v951 = vmul.f32 %v950, 1.442695
    %v952 = vpow.pop %v951
    %v953 = vadd.f32 %v952, 1.0
    %v954 = vrcp.pop %v953
    %v955 = vmul.f32 1.0, %v954
    %v956 = vtanh.pop %v949
    %v957 = vmul.f32 %v955, %v867
    %959 = vrot.lane.b32.xlu0 %v956, 96
    %v960 = vpop.permute.xlu0 %959
    %v962 = vmul.f32 %v955, %v960
    %964 = vrot.lane.b32.xlu0 %v962, 96
    %v965 = vpop.permute.xlu0 %964
    %v967 = vadd.f32 %v957, %v965
    %v968 = vtanh.pop %v967
    %970 = vrot.lane.b32.xlu0 %v968, 96
    %v971 = vpop.permute.xlu0 %970
    %v973 = vmul.f32 %v955, %v971
    %v974 = vld [vmem:[%s4] sm:$0xff]
    %v975 = vld [vmem:[%s4 + $0x8] sm:$0xff]
    %v976 = vld [vmem:[%s4 + $0x10] sm:$0xff]
    %v977 = vld [vmem:[%s4 + $0x18] sm:$0xff]
    %v978 = vld [vmem:[%s5] sm:$0x1]
    %v980 = vlaneseq
    %v981 = vshrl.u32 %v980, 7
    %v982 = vsub.s32 0, %v981
    %v983 = vrot.slane %v978, %v982
    %986 = vrot.lane.b32.xlu0 %v973, 32
    %v987 = vpop.permute.xlu0 %986
    %v988 = vsel %vm175, %v987, 0
    %990 = vmatprep.subr.mxu0 0.0
    %991 = vmatpush1.msra.mxu0 %v974
    %992 = vmatprep.subr.mxu0 0.0
    %993 = vmatpush1.msra.mxu0 %v975
    %994 = vmatprep.subr.mxu0 0.0
    %995 = vmatpush1.msra.mxu0 %v976
    %996 = vmatprep.subr.mxu0 0.0
    %997 = vmatpush1.msra.mxu0 %v977
    %998 = vmatprep.subr.mxu0 0.0
    %999 = vmatpush1.msra.mxu0 0.0
    %1000 = vmatprep.subr.mxu0 0.0
    %1001 = vmatpush1.msra.mxu0 0.0
    %1002 = vmatprep.subr.mxu0 0.0
    %1003 = vmatpush1.msra.mxu0 0.0
    %1004 = vmatprep.subr.mxu0 0.0
    %1005 = vmatpush1.msra.mxu0 0.0
    %1006 = vmatprep.subr.mxu0 0.0
    %1007 = vmatpush1.msra.mxu0 0.0
    %1008 = vmatprep.subr.mxu0 0.0
    %1009 = vmatpush1.msra.mxu0 0.0
    %1010 = vmatprep.subr.mxu0 0.0
    %1011 = vmatpush1.msra.mxu0 0.0
    %1012 = vmatprep.subr.mxu0 0.0
    %1013 = vmatpush1.msra.mxu0 0.0
    %1014 = vmatprep.subr.mxu0 0.0
    %1015 = vmatpush1.msra.mxu0 0.0
    %1016 = vmatprep.subr.mxu0 0.0
    %1017 = vmatpush1.msra.mxu0 0.0
    %1018 = vmatprep.subr.mxu0 0.0
    %1019 = vmatpush1.msra.mxu0 0.0
    %1020 = vmatprep.subr.mxu0 0.0
    %1021 = vmatpush1.msra.mxu0 0.0
    %1022 = vmatprep.subr.mxu0 0.0
    %1023 = vmatpush1.msra.mxu0 0.0
    %1024 = vmatprep.subr.mxu0 0.0
    %1025 = vmatpush1.msra.mxu0 0.0
    %1026 = vmatprep.subr.mxu0 0.0
    %1027 = vmatpush1.msra.mxu0 0.0
    %1028 = vmatprep.subr.mxu0 0.0
    %1029 = vmatpush1.msra.mxu0 0.0
    %1030 = vmatprep.subr.mxu0 0.0
    %1031 = vmatpush1.msra.mxu0 0.0
    %1032 = vmatprep.subr.mxu0 0.0
    %1033 = vmatpush1.msra.mxu0 0.0
    %1034 = vmatprep.subr.mxu0 0.0
    %1035 = vmatpush1.msra.mxu0 0.0
    %1036 = vmatprep.subr.mxu0 0.0
    %1037 = vmatpush1.msra.mxu0 0.0
    %1038 = vmatprep.subr.mxu0 0.0
    %1039 = vmatpush1.msra.mxu0 0.0
    %1040 = vmatprep.subr.mxu0 0.0
    %1041 = vmatpush1.msra.mxu0 0.0
    %1042 = vmatprep.subr.mxu0 0.0
    %1043 = vmatpush1.msra.mxu0 0.0
    %1044 = vmatprep.subr.mxu0 0.0
    %1045 = vmatpush1.msra.mxu0 0.0
    %1046 = vmatprep.subr.mxu0 0.0
    %1047 = vmatpush1.msra.mxu0 0.0
    %1048 = vmatprep.subr.mxu0 0.0
    %1049 = vmatpush1.msra.mxu0 0.0
    %1050 = vmatprep.subr.mxu0 0.0
    %1051 = vmatpush1.msra.mxu0 0.0
    %1052 = vmatprep.subr.mxu0 0.0
    %1053 = vmatpush1.msra.mxu0 0.0
    %1054 = vmatprep.mubr.f32.mxu0 0.0
    %1055 = vmatmul.mubr.f32.gmra.mrb[0].mxu0 %v988
    %v1056 = vpop.f32.mrb[0].mxu0
    %v1057 = vadd.f32 %v983, %v1056
    %v1058 = vpop.f32.mrb[0].mxu0
    %1059 = vdwg.mxu0
    %1060 = vst [vmem:[#allocation2] sm:$0xff] %v1057
    // Predicated region
    $region26: #{tpu_custom_call.1} parent=1 // pred_check
      _
    $region27: #{tpu_custom_call.1} parent=1 // pred_check_branch
      %1062 = sbr.rel (0) target = $region29
    $region28: #{tpu_custom_call.1} parent=1 // pred_region
      %s1064 = ssub.s32 128, 128
      %1065 = vsyncadd [#allocation3], %s1064
      %s1067 = sshll.u32 [#allocation2], 4
      %s1068 = int_to_ptr.vmem [resolvable:$true] %s1067
      %1070 = dma.vmem_to_hbm [thread:$0]  %s1068, 128, %s6, [#allocation3]
    $region29: #{tpu_custom_call.1} parent=1 // pred_fallthru
      _
    // Predicated region
    $region30: #{tpu_custom_call.1} parent=1 // pred_check
      _
    $region31: #{tpu_custom_call.1} parent=1 // pred_check_branch
      %1072 = sbr.rel (0) target = $region33
    $region32: #{tpu_custom_call.1} parent=1 // pred_region
      %1073 = dma.done [#allocation3], 128
    $region33: #{tpu_custom_call.1} parent=1 // pred_fallthru
      _
    %1074 = vsyncpa [#allocation3], 1

</llo_original>
